<compile_context>
chip_gen: v7x
topology: tpu7x:2x2x1
jax: 0.10.0
libtpu: 0.0.40
codegen_flags: <defaults>
</compile_context>

<pallas_src>
import functools

import jax
import jax.numpy as jnp
from jax.experimental import pallas as pl
from jax.experimental.pallas import tpu as pltpu


# ----------------------------- kernel ---------------------------------------

def _residual_block_kernel(x_ref, w1t_ref, b1_ref, w2t_ref, b2_ref, o_ref):
    """Fused y = x + W2ᵀ·relu(W1ᵀ·x + b1) + b2 over one (bb, C, tc) block.

    x_ref  : (bb, C,  T)  activations, channels on sublanes, pixels on lanes (native dtype)
    w1t_ref: (Hd, C)      first 1x1 conv weight (transposed, activation dtype)
    b1_ref : (Hd, 1)      f32
    w2t_ref: (C,  Hd)     second 1x1 conv weight (transposed, activation dtype)
    b2_ref : (C,  1)      f32
    o_ref  : (bb, C,  T)
    """
    # Resident parameters: load once per grid step, reuse for every packed image.
    w1t = w1t_ref[...]
    w2t = w2t_ref[...]
    b1 = b1_ref[...]
    b2 = b2_ref[...]

    bb = x_ref.shape[0]
    # Small static unroll over the batch-packed images in this block (bb is capped in the
    # wrapper). Each iteration is an independent 2-D, MXU-friendly slab: no transposes, no
    # batched/broadcast matmuls.
    for b in range(bb):
        x = x_ref[b]                                                       # (C, T) native
        # First 1x1 conv: MXU consumes the native (possibly bf16) activations directly,
        # accumulating in f32.
        h = jnp.dot(w1t, x, preferred_element_type=jnp.float32)           # (Hd, T) f32
        h = jnp.maximum(h + b1, 0.0)                                       # bias + ReLU
        # Second 1x1 conv: feed the MXU in the weight/activation dtype, accumulate in f32.
        f = jnp.dot(w2t, h.astype(w2t.dtype),
                    preferred_element_type=jnp.float32)                    # (C, T) f32
        # Residual + bias in f32 (x promotes), downcast once on store.
        o_ref[b] = (x + f + b2).astype(o_ref.dtype)


# ----------------------------- tiling ---------------------------------------

_TARGET_X_BLOCK_BYTES = 1 << 20   # ~1 MiB activation block per grid step (amortize overhead)
_VMEM_PIPELINE_BUDGET = 12 << 20  # est. per-step pipeline footprint kept well under the limit
_VMEM_LIMIT_BYTES = 32 << 20      # safe on v5e (raises 16 MiB default), v6e and v7x
_MAX_BATCH_PACK = 8               # cap static unroll of the in-kernel batch loop


def _round_down_mult(x, m):
    return (x // m) * m


def _choose_block(B, C, Hd, HW, act_bytes):
    """Pick (bb, tc): batch-pack factor and lane-tile size.

    Targets ~1 MiB of activation bytes per grid step while keeping the whole per-step VMEM
    footprint within budget: double-buffered x block (2*C), double-buffered out block (2*C),
    the f32 (Hd, tc) intermediate h, and the f32 f block (C)  ->  (5*C + Hd) f32 per lane.
    """
    lanes_target = max(128, _TARGET_X_BLOCK_BYTES // max(1, C * act_bytes))
    lanes_vmem = max(128, _VMEM_PIPELINE_BUDGET // (4 * (5 * C + Hd)))
    lanes = min(lanes_target, lanes_vmem)         # total lanes per block = bb * tc

    if HW <= lanes:
        tc = HW                                   # full spatial dim: always a legal block dim
        bb = max(1, min(B, lanes // HW, _MAX_BATCH_PACK))   # pack several images per block
    else:
        # Lane-dense partial tiling of HW; the tail block is masked by Pallas (cdiv grid).
        tc = max(128, _round_down_mult(lanes, 128))
        bb = 1

    # Keep >=2 grid programs on a parallel axis when possible (v7x has 2 TensorCores).
    if pl.cdiv(B, bb) * pl.cdiv(HW, tc) < 2:
        if B >= 2:
            bb = (B + 1) // 2
        elif HW > 128 and tc > 128:
            tc = max(128, _round_down_mult(pl.cdiv(HW, 2) + 127, 128))
    return bb, tc


# ----------------------------- wrapper ---------------------------------------

@jax.jit
def residual_block_forward(x_nchw, w1, b1, w2, b2):
    """y = x + F(x) with F = 1x1-conv -> ReLU -> 1x1-conv, all fused in Pallas.

    x_nchw : [B, C, H, W]   (PyTorch NCHW convention, kept as-is -- no transpose)
    w1     : [C, Hd]        first 1x1 conv weight
    b1     : [1, Hd]
    w2     : [Hd, C]        second 1x1 conv weight
    b2     : [1, C]
    """
    B, C, H, W = x_nchw.shape
    Hd = w1.shape[1]
    HW = H * W
    act_dtype = x_nchw.dtype
    act_bytes = jnp.dtype(act_dtype).itemsize

    # Pure reshape (no data movement): pixels on the lane axis, channels contract.
    x_flat = x_nchw.reshape(B, C, HW)

    bb, tc = _choose_block(B, C, Hd, HW, act_bytes)
    grid = (pl.cdiv(B, bb), pl.cdiv(HW, tc))

    # Weights in the activation dtype so bf16 activations hit the MXU as bf16 x bf16
    # (f32 accumulation preserved via preferred_element_type). Biases stay f32.
    w1t = jnp.transpose(w1).astype(act_dtype)            # (Hd, C)
    w2t = jnp.transpose(w2).astype(act_dtype)            # (C, Hd)
    b1c = jnp.reshape(b1, (Hd, 1)).astype(jnp.float32)   # (Hd, 1)
    b2c = jnp.reshape(b2, (C, 1)).astype(jnp.float32)    # (C, 1)

    n_px = B * HW
    w_bytes = jnp.dtype(act_dtype).itemsize
    cost = pl.CostEstimate(
        flops=4 * n_px * C * Hd,                                   # two matmuls (mul+add)
        transcendentals=0,
        bytes_accessed=2 * n_px * C * act_bytes
        + 2 * C * Hd * w_bytes + (Hd + C) * 4,
    )

    out = pl.pallas_call(
        _residual_block_kernel,
        out_shape=jax.ShapeDtypeStruct((B, C, HW), act_dtype),
        grid_spec=pltpu.PrefetchScalarGridSpec(
            num_scalar_prefetch=0,
            grid=grid,
            in_specs=[
                pl.BlockSpec((bb, C, tc), lambda bi, j: (bi, 0, j)),   # activation block
                # Resident parameters (constant index_map). They are a few KB here; for very
                # large C*Hd they should be single-buffered (pipeline_mode=pl.Buffered(1)) to
                # halve their VMEM footprint — negligible at these sizes, so omitted.
                pl.BlockSpec((Hd, C), lambda bi, j: (0, 0)),           # w1ᵀ
                pl.BlockSpec((Hd, 1), lambda bi, j: (0, 0)),           # b1
                pl.BlockSpec((C, Hd), lambda bi, j: (0, 0)),           # w2ᵀ
                pl.BlockSpec((C, 1), lambda bi, j: (0, 0)),            # b2
            ],
            out_specs=pl.BlockSpec((bb, C, tc), lambda bi, j: (bi, 0, j)),
        ),
        compiler_params=pltpu.CompilerParams(
            dimension_semantics=("parallel", "parallel"),
            vmem_limit_bytes=_VMEM_LIMIT_BYTES,
        ),
        cost_estimate=cost,
    )(x_flat, w1t, b1c, w2t, b2c)

    return out.reshape(B, C, H, W)


# ----------------------------- reference & demo ------------------------------

def _reference_forward(x_nchw, w1, b1, w2, b2):
    """Pure-JAX reference of y = x + F(x)."""
    B, C, H, W = x_nchw.shape
    xr = jnp.transpose(x_nchw, (0, 2, 3, 1)).reshape(-1, C).astype(jnp.float32)
    h = jnp.maximum(xr @ w1 + b1, 0.0)
    f = h @ w2 + b2
    y = xr + f
    return jnp.transpose(y.reshape(B, H, W, C), (0, 3, 1, 2)).astype(x_nchw.dtype)


if __name__ == "__main__":
    # Small shapes consistent with the module's forward: NCHW image input.
    B, C, H, W = 2, 4, 16, 16
    HIDDEN = 32

    key = jax.random.PRNGKey(0)
    kx, k1, k2, kb1, kb2 = jax.random.split(key, 5)

    x = jax.random.normal(kx, (B, C, H, W), dtype=jnp.float32)

    # Deterministic parameter init; scaled small so F is (approximately) 1-Lipschitz,
    # matching the invertibility assumption of InvertibleResidualLayer.
    # TODO(synk): spectral normalization (enforced 1-Lipschitz F) and the fixed-point
    #             inverse/backward pass are training-time machinery, not forward math.
    w1 = 0.1 * jax.random.normal(k1, (C, HIDDEN), dtype=jnp.float32)
    b1 = 0.01 * jax.random.normal(kb1, (1, HIDDEN), dtype=jnp.float32)
    w2 = 0.1 * jax.random.normal(k2, (HIDDEN, C), dtype=jnp.float32)
    b2 = 0.01 * jax.random.normal(kb2, (1, C), dtype=jnp.float32)

    y = jax.block_until_ready(residual_block_forward(x, w1, b1, w2, b2))

    y_ref = _reference_forward(x, w1, b1, w2, b2)
    assert y.shape == (B, C, H, W)
    assert jnp.allclose(y, y_ref, atol=1e-5, rtol=1e-5), "mismatch vs reference"

    print("KERNEL_OK")
</pallas_src>

<mosaic_0001>
module attributes {stable_mosaic.version = 11 : i64} {
  func.func @_residual_block_kernel(%arg0: i32, %arg1: i32, %arg2: memref<1x4x256xf32, #tpu.memory_space<vmem>>, %arg3: memref<32x4xf32, #tpu.memory_space<vmem>>, %arg4: memref<32x1xf32, #tpu.memory_space<vmem>>, %arg5: memref<4x32xf32, #tpu.memory_space<vmem>>, %arg6: memref<4x1xf32, #tpu.memory_space<vmem>>, %arg7: memref<1x4x256xf32, #tpu.memory_space<vmem>>) attributes {dimension_semantics = [#tpu.dimension_semantics<parallel>, #tpu.dimension_semantics<parallel>], iteration_bounds = array<i64: 2, 1>, scalar_prefetch = 0 : i64, scratch_operands = 0 : i64, tpu.core_type = #tpu.core_type<tc>, window_params = [{transform_indices = @transform_0, window_bounds = array<i64: 1, 4, 256>}, {pipeline_mode = #tpu.pipeline_mode<synchronous>, transform_indices = @transform_1, window_bounds = array<i64: 32, 4>}, {pipeline_mode = #tpu.pipeline_mode<synchronous>, transform_indices = @transform_2, window_bounds = array<i64: 32, 1>}, {pipeline_mode = #tpu.pipeline_mode<synchronous>, transform_indices = @transform_3, window_bounds = array<i64: 4, 32>}, {pipeline_mode = #tpu.pipeline_mode<synchronous>, transform_indices = @transform_4, window_bounds = array<i64: 4, 1>}, {transform_indices = @transform_5, window_bounds = array<i64: 1, 4, 256>}]} {
    %c0 = arith.constant 0 : index
    %c0_0 = arith.constant 0 : index
    %0 = vector.load %arg3[%c0, %c0_0] : memref<32x4xf32, #tpu.memory_space<vmem>>, vector<32x4xf32>
    %c0_1 = arith.constant 0 : index
    %c0_2 = arith.constant 0 : index
    %1 = vector.load %arg5[%c0_1, %c0_2] : memref<4x32xf32, #tpu.memory_space<vmem>>, vector<4x32xf32>
    %c0_3 = arith.constant 0 : index
    %c0_4 = arith.constant 0 : index
    %2 = vector.load %arg4[%c0_3, %c0_4] : memref<32x1xf32, #tpu.memory_space<vmem>>, vector<32x1xf32>
    %c0_5 = arith.constant 0 : index
    %c0_6 = arith.constant 0 : index
    %3 = vector.load %arg6[%c0_5, %c0_6] : memref<4x1xf32, #tpu.memory_space<vmem>>, vector<4x1xf32>
    %c0_7 = arith.constant 0 : index
    %c0_8 = arith.constant 0 : index
    %c0_9 = arith.constant 0 : index
    %4 = vector.load %arg2[%c0_7, %c0_8, %c0_9] : memref<1x4x256xf32, #tpu.memory_space<vmem>>, vector<1x4x256xf32>
    %5 = vector.shape_cast %4 : vector<1x4x256xf32> to vector<4x256xf32>
    %cst = arith.constant dense<0.000000e+00> : vector<32x256xf32>
    %6 = tpu.matmul %0, %5, %cst {dimension_numbers = #tpu.dot_dimension_numbers<[1], [0], [0], [1], [0, 0, 1, 1], [], []>} : vector<32x4xf32>, vector<4x256xf32>, vector<32x256xf32> -> vector<32x256xf32>
    %7 = vector.broadcast %2 : vector<32x1xf32> to vector<32x256xf32>
    %8 = arith.addf %6, %7 : vector<32x256xf32>
    %cst_10 = arith.constant 0.000000e+00 : f32
    %9 = vector.broadcast %cst_10 : f32 to vector<32x256xf32>
    %10 = arith.maximumf %8, %9 : vector<32x256xf32>
    %cst_11 = arith.constant dense<0.000000e+00> : vector<4x256xf32>
    %11 = tpu.matmul %1, %10, %cst_11 {dimension_numbers = #tpu.dot_dimension_numbers<[1], [0], [0], [1], [0, 0, 1, 1], [], []>} : vector<4x32xf32>, vector<32x256xf32>, vector<4x256xf32> -> vector<4x256xf32>
    %12 = arith.addf %5, %11 : vector<4x256xf32>
    %13 = vector.broadcast %3 : vector<4x1xf32> to vector<4x256xf32>
    %14 = arith.addf %12, %13 : vector<4x256xf32>
    %c0_12 = arith.constant 0 : index
    %c0_13 = arith.constant 0 : index
    %c0_14 = arith.constant 0 : index
    %15 = vector.load %arg7[%c0_12, %c0_13, %c0_14] : memref<1x4x256xf32, #tpu.memory_space<vmem>>, vector<1x4x256xf32>
    %16 = vector.shape_cast %15 : vector<1x4x256xf32> to vector<4x256xf32>
    %17 = vector.shape_cast %14 : vector<4x256xf32> to vector<1x4x256xf32>
    tpu.vector_store %arg7[%c0_12, %c0_13, %c0_14], %17 {strides = array<i32>} : memref<1x4x256xf32, #tpu.memory_space<vmem>>, vector<1x4x256xf32>,
    return
  }
  func.func @transform_0(%arg0: i32, %arg1: i32) -> (i32, i32, i32) {
    %c0_i32 = arith.constant 0 : i32
    %c0_i32_0 = arith.constant 0 : i32
    return %arg0, %c0_i32, %arg1 : i32, i32, i32
  }
  func.func @transform_1(%arg0: i32, %arg1: i32) -> (i32, i32) {
    %c0_i32 = arith.constant 0 : i32
    %c0_i32_0 = arith.constant 0 : i32
    %c0_i32_1 = arith.constant 0 : i32
    return %c0_i32, %c0_i32_0 : i32, i32
  }
  func.func @transform_2(%arg0: i32, %arg1: i32) -> (i32, i32) {
    %c0_i32 = arith.constant 0 : i32
    %c0_i32_0 = arith.constant 0 : i32
    %c0_i32_1 = arith.constant 0 : i32
    return %c0_i32, %c0_i32_0 : i32, i32
  }
  func.func @transform_3(%arg0: i32, %arg1: i32) -> (i32, i32) {
    %c0_i32 = arith.constant 0 : i32
    %c0_i32_0 = arith.constant 0 : i32
    %c0_i32_1 = arith.constant 0 : i32
    return %c0_i32, %c0_i32_0 : i32, i32
  }
  func.func @transform_4(%arg0: i32, %arg1: i32) -> (i32, i32) {
    %c0_i32 = arith.constant 0 : i32
    %c0_i32_0 = arith.constant 0 : i32
    %c0_i32_1 = arith.constant 0 : i32
    return %c0_i32, %c0_i32_0 : i32, i32
  }
  func.func @transform_5(%arg0: i32, %arg1: i32) -> (i32, i32, i32) {
    %c0_i32 = arith.constant 0 : i32
    %c0_i32_0 = arith.constant 0 : i32
    return %arg0, %c0_i32, %arg1 : i32, i32, i32
  }
}

</mosaic_0001>

<llo_original>
// kernel: residual_block_forward.1
$region0: #{residual_block_forward.1}
  #allocation0 [shape = 'u32[]', space=smem, size = 0x4, offset = 0x4, fixed_abs, tag = 'smem constant byte address 0x4 - core index']
  #allocation1 [shape = 'u32[144,128]{1,0:T(1,128)}', space=vmem, size = 0x12000, scoped, tag = 'internal scratch']
  %s0 = inlined_call_operand.vmem [shape: f32[2,4,256], index: 0, kind: input, shape index: {}]
  %s1 = inlined_call_operand.vmem [shape: f32[32,4], index: 1, kind: input, shape index: {}]
  %s2 = inlined_call_operand.vmem [shape: f32[32,1], index: 2, kind: input, shape index: {}]
  %s3 = inlined_call_operand.vmem [shape: f32[4,32], index: 3, kind: input, shape index: {}]
  %s4 = inlined_call_operand.vmem [shape: f32[4,1], index: 4, kind: input, shape index: {}]
  %s5 = inlined_call_operand.vmem [shape: f32[2,4,256], index: 5, kind: output, shape index: {}]
  %s6 = sld [smem:[#allocation0]]
  $region53: #{residual_block_forward.1} parent=0
    _
  %s8 = ssub.s32 1, %s6
  %s9 = scalar_select 0, %s8, %s6
  loop: start=0, step=1, limit=4
  $region2: #{residual_block_forward.1} parent=0 // loop_pre_header
    _
  $region3: #{residual_block_forward.1} parent=0 // loop_header
    %s11 = sphi 0, %s15
    %p12 = scmp.ge.s32.totalorder %s11, 4
    %s18 = sphi 0, %s30
    %s19 = sphi 0, %s26
    %s20 = sphi 0, %s18
    %s21 = sphi 0, %s19
    %s22 = sphi 0, %s20
    %s23 = sphi 0, %s21
    %s35 = sphi 0, %s37
    %s38 = sphi 0, %s35
    %s39 = sphi 0, %s38
    %s55 = sphi 0, %s39
    %s59 = sphi 0, %s59
    %s61 = sphi 0, %s59
    %s62 = sphi 0, %s61
    %s76 = sphi 0, %s62
    %s80 = sphi 0, %s80
    %s82 = sphi 0, %s80
    %s83 = sphi 0, %s82
    %s97 = sphi 0, %s83
    %s101 = sphi 0, %s101
    %s103 = sphi 0, %s101
    %s104 = sphi 0, %s103
    %s118 = sphi 0, %s104
    %s122 = sphi 0, %s122
    %s124 = sphi 0, %s122
    %s125 = sphi 0, %s124
    %s139 = sphi 0, %s125
    %s147 = sphi 0, %s149
    %s150 = sphi 0, %s147
    %s151 = sphi 0, %s150
    %s167 = sphi 0, %s151
  $region4: #{residual_block_forward.1} parent=0 // loop_header_branch
    %14 = sbr.rel (%p12) target = $region8
  $region5: #{residual_block_forward.1} parent=0 // loop_body
    %s16 = ssub.s32 %s11, 1
    %s17 = ssub.s32 %s11, 2
    %s24 = sadd.s32 1, %s19
    %p25 = scmp.ge.s32.totalorder %s24, 1
    %s26 = scalar_select %p25, 0, %s24
    %s27 = sadd.s32 1, %s18
    %s28 = scalar_select %p25, %s27, %s18
    %p29 = scmp.ge.s32.totalorder %s28, 2
    %s30 = scalar_select %p29, 0, %s28
    %s31 = ssub.s32 %s18, %s30
    %s32 = ssub.s32 %s19, %s26
    %s33 = sor.u32 %s31, %s32
    %p34 = scmp.eq.s32.totalorder %s33, 0
    %s36 = sadd.s32 %s35, 1
    %s37 = scalar_select %p34, %s35, %s36
    %p40 = pneg %p34
    %p41 = scmp.eq.s32.totalorder %s11, 1
    %p42 = por %p40, %p41
    %p43 = scmp.ne.s32.totalorder %s35, %s38
    %p44 = scmp.eq.s32.totalorder %s11, 0
    %p45 = por %p43, %p44
    %p46 = scmp.ne.s32.totalorder %s35, %s38
    %p47 = scmp.eq.s32.totalorder %s16, 1
    %p48 = por %p46, %p47
    %p49 = scmp.ne.s32.totalorder %s38, %s39
    %p50 = scmp.eq.s32.totalorder %s16, 0
    %p51 = por %p49, %p50
    %p52 = scmp.ne.s32.totalorder %s38, %s39
    %p53 = scmp.eq.s32.totalorder %s17, 1
    %p54 = por %p52, %p53
    %p56 = scmp.ne.s32.totalorder %s39, %s55
    %p57 = scmp.eq.s32.totalorder %s17, 0
    %p58 = por %p56, %p57
    %s60 = sadd.s32 %s59, 1
    %p63 = scmp.eq.s32.totalorder %s11, 1
    %p64 = scmp.ne.s32.totalorder %s59, %s61
    %p65 = scmp.eq.s32.totalorder %s11, 0
    %p66 = por %p64, %p65
    %p67 = scmp.ne.s32.totalorder %s59, %s61
    %p68 = scmp.eq.s32.totalorder %s16, 1
    %p69 = por %p67, %p68
    %p70 = scmp.ne.s32.totalorder %s61, %s62
    %p71 = scmp.eq.s32.totalorder %s16, 0
    %p72 = por %p70, %p71
    %p73 = scmp.ne.s32.totalorder %s61, %s62
    %p74 = scmp.eq.s32.totalorder %s17, 1
    %p75 = por %p73, %p74
    %p77 = scmp.ne.s32.totalorder %s62, %s76
    %p78 = scmp.eq.s32.totalorder %s17, 0
    %p79 = por %p77, %p78
    %s81 = sadd.s32 %s80, 1
    %p84 = scmp.eq.s32.totalorder %s11, 1
    %p85 = scmp.ne.s32.totalorder %s80, %s82
    %p86 = scmp.eq.s32.totalorder %s11, 0
    %p87 = por %p85, %p86
    %p88 = scmp.ne.s32.totalorder %s80, %s82
    %p89 = scmp.eq.s32.totalorder %s16, 1
    %p90 = por %p88, %p89
    %p91 = scmp.ne.s32.totalorder %s82, %s83
    %p92 = scmp.eq.s32.totalorder %s16, 0
    %p93 = por %p91, %p92
    %p94 = scmp.ne.s32.totalorder %s82, %s83
    %p95 = scmp.eq.s32.totalorder %s17, 1
    %p96 = por %p94, %p95
    %p98 = scmp.ne.s32.totalorder %s83, %s97
    %p99 = scmp.eq.s32.totalorder %s17, 0
    %p100 = por %p98, %p99
    %s102 = sadd.s32 %s101, 1
    %p105 = scmp.eq.s32.totalorder %s11, 1
    %p106 = scmp.ne.s32.totalorder %s101, %s103
    %p107 = scmp.eq.s32.totalorder %s11, 0
    %p108 = por %p106, %p107
    %p109 = scmp.ne.s32.totalorder %s101, %s103
    %p110 = scmp.eq.s32.totalorder %s16, 1
    %p111 = por %p109, %p110
    %p112 = scmp.ne.s32.totalorder %s103, %s104
    %p113 = scmp.eq.s32.totalorder %s16, 0
    %p114 = por %p112, %p113
    %p115 = scmp.ne.s32.totalorder %s103, %s104
    %p116 = scmp.eq.s32.totalorder %s17, 1
    %p117 = por %p115, %p116
    %p119 = scmp.ne.s32.totalorder %s104, %s118
    %p120 = scmp.eq.s32.totalorder %s17, 0
    %p121 = por %p119, %p120
    %s123 = sadd.s32 %s122, 1
    %p126 = scmp.eq.s32.totalorder %s11, 1
    %p127 = scmp.ne.s32.totalorder %s122, %s124
    %p128 = scmp.eq.s32.totalorder %s11, 0
    %p129 = por %p127, %p128
    %p130 = scmp.ne.s32.totalorder %s122, %s124
    %p131 = scmp.eq.s32.totalorder %s16, 1
    %p132 = por %p130, %p131
    %p133 = scmp.ne.s32.totalorder %s124, %s125
    %p134 = scmp.eq.s32.totalorder %s16, 0
    %p135 = por %p133, %p134
    %p136 = scmp.ne.s32.totalorder %s124, %s125
    %p137 = scmp.eq.s32.totalorder %s17, 1
    %p138 = por %p136, %p137
    %p140 = scmp.ne.s32.totalorder %s125, %s139
    %p141 = scmp.eq.s32.totalorder %s17, 0
    %p142 = por %p140, %p141
    %s143 = ssub.s32 %s18, %s30
    %s144 = ssub.s32 %s19, %s26
    %s145 = sor.u32 %s143, %s144
    %p146 = scmp.eq.s32.totalorder %s145, 0
    %s148 = sadd.s32 %s147, 1
    %s149 = scalar_select %p146, %s147, %s148
    %p152 = pneg %p146
    %p153 = scmp.eq.s32.totalorder %s11, 1
    %p154 = por %p152, %p153
    %p155 = scmp.ne.s32.totalorder %s147, %s150
    %p156 = scmp.eq.s32.totalorder %s11, 0
    %p157 = por %p155, %p156
    %p158 = scmp.ne.s32.totalorder %s147, %s150
    %p159 = scmp.eq.s32.totalorder %s16, 1
    %p160 = por %p158, %p159
    %p161 = scmp.ne.s32.totalorder %s150, %s151
    %p162 = scmp.eq.s32.totalorder %s16, 0
    %p163 = por %p161, %p162
    %p164 = scmp.ne.s32.totalorder %s150, %s151
    %p165 = scmp.eq.s32.totalorder %s17, 1
    %p166 = por %p164, %p165
    %p168 = scmp.ne.s32.totalorder %s151, %s167
    %p169 = scmp.eq.s32.totalorder %s17, 0
    %p170 = por %p168, %p169
    %p171 = scmp.le.s32.totalorder 1, %s11
    %p172 = scmp.lt.s32.totalorder %s11, 3
    %p173 = pnand %p171, %p172
    %p174 = pneg %p173
    // Predicated region
    $region9: #{residual_block_forward.1} parent=5 // pred_check
      _
    $region10: #{residual_block_forward.1} parent=5 // pred_check_branch
      %176 = sbr.rel (%p173) target = $region12
    $region11: #{residual_block_forward.1} parent=5 // pred_region
      %s177 = ssub.s32 %s11, 1
      // Predicated region
      $region13: #{residual_block_forward.1} parent=11 // pred_check
        %p178 = pneg %p72
      $region14: #{residual_block_forward.1} parent=11 // pred_check_branch
        %180 = sbr.rel (%p178) target = $region16
      $region15: #{residual_block_forward.1} parent=11 // pred_region
        _
      $region16: #{residual_block_forward.1} parent=11 // pred_fallthru
        _
      // Predicated region
      $region17: #{residual_block_forward.1} parent=11 // pred_check
        %p181 = pneg %p93
      $region18: #{residual_block_forward.1} parent=11 // pred_check_branch
        %183 = sbr.rel (%p181) target = $region20
      $region19: #{residual_block_forward.1} parent=11 // pred_region
        _
      $region20: #{residual_block_forward.1} parent=11 // pred_fallthru
        _
      // Predicated region
      $region21: #{residual_block_forward.1} parent=11 // pred_check
        %p184 = pneg %p114
      $region22: #{residual_block_forward.1} parent=11 // pred_check_branch
        %186 = sbr.rel (%p184) target = $region24
      $region23: #{residual_block_forward.1} parent=11 // pred_region
        _
      $region24: #{residual_block_forward.1} parent=11 // pred_fallthru
        _
      // Predicated region
      $region25: #{residual_block_forward.1} parent=11 // pred_check
        %p187 = pneg %p135
      $region26: #{residual_block_forward.1} parent=11 // pred_check_branch
        %189 = sbr.rel (%p187) target = $region28
      $region27: #{residual_block_forward.1} parent=11 // pred_region
        _
      $region28: #{residual_block_forward.1} parent=11 // pred_fallthru
        _
    $region12: #{residual_block_forward.1} parent=5 // pred_fallthru
      _
    %p190 = scmp.lt.s32.totalorder %s11, 2
    // Predicated region
    $region29: #{residual_block_forward.1} parent=5 // pred_check
      %p191 = pneg %p190
    $region30: #{residual_block_forward.1} parent=5 // pred_check_branch
      %193 = sbr.rel (%p191) target = $region32
    $region31: #{residual_block_forward.1} parent=5 // pred_region
      // Predicated region
      $region33: #{residual_block_forward.1} parent=31 // pred_check
        %p194 = pneg %p45
      $region34: #{residual_block_forward.1} parent=31 // pred_check_branch
        %196 = sbr.rel (%p194) target = $region36
      $region35: #{residual_block_forward.1} parent=31 // pred_region
        %s197 = smul.u32 2, %s19
        %p198 = scmp.lt.s32.totalorder %s18, 1
        %s199 = scalar_select %p198, %s18, 1
        %p200 = scmp.lt.s32.totalorder %s197, 1
        %s201 = scalar_select %p200, %s197, 1
        %s202 = smul.addr %s199, 2
        %s203 = sadd.s32 %s201, %s202
        %s204 = smul.addr %s203, 4
        %s205 = scalar_lea.vmem %s0, %s204
        %s206 = smul.u32 2, %s19
      $region36: #{residual_block_forward.1} parent=31 // pred_fallthru
        _
    $region32: #{residual_block_forward.1} parent=5 // pred_fallthru
      _
    %p207 = scmp.le.s32.totalorder 1, %s11
    %p208 = scmp.lt.s32.totalorder %s11, 3
    %p209 = pnand %p207, %p208
    %p210 = pneg %p209
    // Predicated region
    $region37: #{residual_block_forward.1} parent=5 // pred_check
      _
    $region38: #{residual_block_forward.1} parent=5 // pred_check_branch
      %212 = sbr.rel (%p209) target = $region40
    $region39: #{residual_block_forward.1} parent=5 // pred_region
      %s213 = ssub.s32 %s11, 1
      %s214 = smul.u32 2, %s21
      %p215 = scmp.lt.s32.totalorder %s20, 1
      %s216 = scalar_select %p215, %s20, 1
      %p217 = scmp.lt.s32.totalorder %s214, 1
      %s218 = scalar_select %p217, %s214, 1
      %s219 = smul.addr %s216, 2
      %s220 = sadd.s32 %s218, %s219
      %s221 = smul.addr %s220, 4
      %s222 = scalar_lea.vmem %s0, %s221
      %p223 = pneg %p51
      %p224 = pneg %p48
      %p225 = pneg %p72
      %p226 = pneg %p69
      %p227 = pneg %p93
      %p228 = pneg %p90
      %p229 = pneg %p114
      %p230 = pneg %p111
      %p231 = pneg %p135
      %p232 = pneg %p132
      %p233 = pneg %p163
      %p234 = pneg %p160
      %s235 = smul.u32 2, %s21
      %p236 = scmp.lt.s32.totalorder %s20, 1
      %s237 = scalar_select %p236, %s20, 1
      %p238 = scmp.lt.s32.totalorder %s235, 1
      %s239 = scalar_select %p238, %s235, 1
      %s240 = smul.addr %s237, 2
      %s241 = sadd.s32 %s239, %s240
      %s242 = smul.addr %s241, 4
      %s243 = scalar_lea.vmem %s5, %s242
      %s244 = smul.u32 2, %s21
      %p245 = scmp.lt.s32.totalorder %s20, 1
      %s246 = scalar_select %p245, %s20, 1
      %p247 = scmp.lt.s32.totalorder %s244, 1
      %s248 = scalar_select %p247, %s244, 1
      %s249 = smul.addr %s246, 2
      %s250 = sadd.s32 %s248, %s249
      %s251 = smul.addr %s250, 4
      %s252 = scalar_lea.vmem %s0, %s251
      %s253 = smul.u32 2, %s21
      %s254 = smul.u32 2, %s21
      %p255 = scmp.lt.s32.totalorder %s20, 1
      %s256 = scalar_select %p255, %s20, 1
      %p257 = scmp.lt.s32.totalorder %s254, 1
      %s258 = scalar_select %p257, %s254, 1
      %s259 = smul.addr %s256, 2
      %s260 = sadd.s32 %s258, %s259
      %s261 = smul.addr %s260, 4
      %s262 = scalar_lea.vmem %s5, %s261
      %s263 = smul.u32 2, %s21
      %v264 = vld [vmem:[%s1] sm:$0xff]
      %v265 = vld [vmem:[%s1 + $0x8] sm:$0xff]
      %v266 = vld [vmem:[%s1 + $0x10] sm:$0xff]
      %v267 = vld [vmem:[%s1 + $0x18] sm:$0xff]
      %v268 = vld [vmem:[%s3] sm:$0xf]
      %v269 = vld [vmem:[%s2] sm:$0xff]
      %v270 = vld [vmem:[%s2 + $0x8] sm:$0xff]
      %v271 = vld [vmem:[%s2 + $0x10] sm:$0xff]
      %v272 = vld [vmem:[%s2 + $0x18] sm:$0xff]
      %v273 = vld [vmem:[%s4] sm:$0xf]
      %v274 = vld [vmem:[%s252] sm:$0xff]
      %276 = vset.pattern.permute.xlu0 0
      %277 = vperm.xlu0 %276, %v269
      %v278 = vpop.permute.xlu0 %277
      %281 = vset.pattern.permute.xlu0 0
      %282 = vperm.xlu0 %281, %v270
      %v283 = vpop.permute.xlu0 %282
      %286 = vset.pattern.permute.xlu0 0
      %287 = vperm.xlu0 %286, %v271
      %v288 = vpop.permute.xlu0 %287
      %291 = vset.pattern.permute.xlu0 0
      %292 = vperm.xlu0 %291, %v272
      %v293 = vpop.permute.xlu0 %292
      %v296 = vcombine.high %v274, %v274
      %vm297 = vcmask 31744
      %v299 = vsel %vm297, %v264, 0
      %v302 = vsel %vm297, %v265, 0
      %v305 = vsel %vm297, %v266, 0
      %v308 = vsel %vm297, %v267, 0
      %vm310 = vcmask 1043456
      %v311 = vsel %vm310, %v274, 0
      %v313 = vsel %vm310, %v296, 0
      %315 = vmatprep.subr.mxu0 %v313
      %316 = vmatpush1.msra.mxu0 %v311
      %317 = vmatprep.subr.mxu0 0.0
      %318 = vmatpush1.msra.mxu0 0.0
      %319 = vmatprep.subr.mxu0 0.0
      %320 = vmatpush1.msra.mxu0 0.0
      %321 = vmatprep.subr.mxu0 0.0
      %322 = vmatpush1.msra.mxu0 0.0
      %323 = vmatprep.subr.mxu0 0.0
      %324 = vmatpush1.msra.mxu0 0.0
      %325 = vmatprep.subr.mxu0 0.0
      %326 = vmatpush1.msra.mxu0 0.0
      %327 = vmatprep.subr.mxu0 0.0
      %328 = vmatpush1.msra.mxu0 0.0
      %329 = vmatprep.subr.mxu0 0.0
      %330 = vmatpush1.msra.mxu0 0.0
      %331 = vmatprep.subr.mxu0 0.0
      %332 = vmatpush1.msra.mxu0 0.0
      %333 = vmatprep.subr.mxu0 0.0
      %334 = vmatpush1.msra.mxu0 0.0
      %335 = vmatprep.subr.mxu0 0.0
      %336 = vmatpush1.msra.mxu0 0.0
      %337 = vmatprep.subr.mxu0 0.0
      %338 = vmatpush1.msra.mxu0 0.0
      %339 = vmatprep.subr.mxu0 0.0
      %340 = vmatpush1.msra.mxu0 0.0
      %341 = vmatprep.subr.mxu0 0.0
      %342 = vmatpush1.msra.mxu0 0.0
      %343 = vmatprep.subr.mxu0 0.0
      %344 = vmatpush1.msra.mxu0 0.0
      %345 = vmatprep.subr.mxu0 0.0
      %346 = vmatpush1.msra.mxu0 0.0
      %347 = vmatprep.subr.mxu0 0.0
      %348 = vmatpush1.msra.mxu0 0.0
      %349 = vmatprep.subr.mxu0 0.0
      %350 = vmatpush1.msra.mxu0 0.0
      %351 = vmatprep.subr.mxu0 0.0
      %352 = vmatpush1.msra.mxu0 0.0
      %353 = vmatprep.subr.mxu0 0.0
      %354 = vmatpush1.msra.mxu0 0.0
      %355 = vmatprep.subr.mxu0 0.0
      %356 = vmatpush1.msra.mxu0 0.0
      %357 = vmatprep.subr.mxu0 0.0
      %358 = vmatpush1.msra.mxu0 0.0
      %359 = vmatprep.subr.mxu0 0.0
      %360 = vmatpush1.msra.mxu0 0.0
      %361 = vmatprep.subr.mxu0 0.0
      %362 = vmatpush1.msra.mxu0 0.0
      %363 = vmatprep.subr.mxu0 0.0
      %364 = vmatpush1.msra.mxu0 0.0
      %365 = vmatprep.subr.mxu0 0.0
      %366 = vmatpush1.msra.mxu0 0.0
      %367 = vmatprep.subr.mxu0 0.0
      %368 = vmatpush1.msra.mxu0 0.0
      %369 = vmatprep.subr.mxu0 0.0
      %370 = vmatpush1.msra.mxu0 0.0
      %371 = vmatprep.subr.mxu0 0.0
      %372 = vmatpush1.msra.mxu0 0.0
      %373 = vmatprep.subr.mxu0 0.0
      %374 = vmatpush1.msra.mxu0 0.0
      %375 = vmatprep.subr.mxu0 0.0
      %376 = vmatpush1.msra.mxu0 0.0
      %377 = vmatprep.subr.mxu0 0.0
      %378 = vmatpush1.msra.mxu0 0.0
      %379 = vmatprep.mubr.f32.mxu0 0.0
      %380 = vmatmul.mubr.f32.gmra.mrb[0].mxu0 %v299
      %v381 = vpop.f32.mrb[0].mxu0
      %v382 = vadd.f32 %v278, %v381
      %v383 = vpop.f32.mrb[0].mxu0
      %v384 = vadd.f32 %v278, %v383
      %385 = vmatprep.mubr.f32.mxu0 0.0
      %386 = vmatmul.mubr.f32.gmra.mrb[0].mxu0 %v302
      %v387 = vpop.f32.mrb[0].mxu0
      %v388 = vadd.f32 %v283, %v387
      %v389 = vpop.f32.mrb[0].mxu0
      %v390 = vadd.f32 %v283, %v389
      %391 = vmatprep.mubr.f32.mxu0 0.0
      %392 = vmatmul.mubr.f32.gmra.mrb[0].mxu0 %v305
      %v393 = vpop.f32.mrb[0].mxu0
      %v394 = vadd.f32 %v288, %v393
      %v395 = vpop.f32.mrb[0].mxu0
      %v396 = vadd.f32 %v288, %v395
      %397 = vmatprep.mubr.f32.mxu0 0.0
      %398 = vmatmul.mubr.f32.gmra.mrb[0].mxu0 %v308
      %v399 = vpop.f32.mrb[0].mxu0
      %v400 = vadd.f32 %v293, %v399
      %v401 = vpop.f32.mrb[0].mxu0
      %v402 = vadd.f32 %v293, %v401
      %403 = vdwg.mxu0
      %v404 = vmax.f32 %v382, 0.0
      %v405 = vmax.f32 %v384, 0.0
      %v406 = vmax.f32 %v388, 0.0
      %v407 = vmax.f32 %v390, 0.0
      %v408 = vmax.f32 %v394, 0.0
      %v409 = vmax.f32 %v396, 0.0
      %v410 = vmax.f32 %v400, 0.0
      %v411 = vmax.f32 %v402, 0.0
      %vm412 = vcmask 261120
      %v414 = vsel %vm412, %v268, 0
      %416 = vmatprep.subr.mxu0 %v405
      %417 = vmatpush1.msra.mxu0 %v404
      %418 = vmatprep.subr.mxu0 %v407
      %419 = vmatpush1.msra.mxu0 %v406
      %420 = vmatprep.subr.mxu0 %v409
      %421 = vmatpush1.msra.mxu0 %v408
      %422 = vmatprep.subr.mxu0 %v411
      %423 = vmatpush1.msra.mxu0 %v410
      %424 = vmatprep.subr.mxu0 0.0
      %425 = vmatpush1.msra.mxu0 0.0
      %426 = vmatprep.subr.mxu0 0.0
      %427 = vmatpush1.msra.mxu0 0.0
      %428 = vmatprep.subr.mxu0 0.0
      %429 = vmatpush1.msra.mxu0 0.0
      %430 = vmatprep.subr.mxu0 0.0
      %431 = vmatpush1.msra.mxu0 0.0
      %432 = vmatprep.subr.mxu0 0.0
      %433 = vmatpush1.msra.mxu0 0.0
      %434 = vmatprep.subr.mxu0 0.0
      %435 = vmatpush1.msra.mxu0 0.0
      %436 = vmatprep.subr.mxu0 0.0
      %437 = vmatpush1.msra.mxu0 0.0
      %438 = vmatprep.subr.mxu0 0.0
      %439 = vmatpush1.msra.mxu0 0.0
      %440 = vmatprep.subr.mxu0 0.0
      %441 = vmatpush1.msra.mxu0 0.0
      %442 = vmatprep.subr.mxu0 0.0
      %443 = vmatpush1.msra.mxu0 0.0
      %444 = vmatprep.subr.mxu0 0.0
      %445 = vmatpush1.msra.mxu0 0.0
      %446 = vmatprep.subr.mxu0 0.0
      %447 = vmatpush1.msra.mxu0 0.0
      %448 = vmatprep.subr.mxu0 0.0
      %449 = vmatpush1.msra.mxu0 0.0
      %450 = vmatprep.subr.mxu0 0.0
      %451 = vmatpush1.msra.mxu0 0.0
      %452 = vmatprep.subr.mxu0 0.0
      %453 = vmatpush1.msra.mxu0 0.0
      %454 = vmatprep.subr.mxu0 0.0
      %455 = vmatpush1.msra.mxu0 0.0
      %456 = vmatprep.subr.mxu0 0.0
      %457 = vmatpush1.msra.mxu0 0.0
      %458 = vmatprep.subr.mxu0 0.0
      %459 = vmatpush1.msra.mxu0 0.0
      %460 = vmatprep.subr.mxu0 0.0
      %461 = vmatpush1.msra.mxu0 0.0
      %462 = vmatprep.subr.mxu0 0.0
      %463 = vmatpush1.msra.mxu0 0.0
      %464 = vmatprep.subr.mxu0 0.0
      %465 = vmatpush1.msra.mxu0 0.0
      %466 = vmatprep.subr.mxu0 0.0
      %467 = vmatpush1.msra.mxu0 0.0
      %468 = vmatprep.subr.mxu0 0.0
      %469 = vmatpush1.msra.mxu0 0.0
      %470 = vmatprep.subr.mxu0 0.0
      %471 = vmatpush1.msra.mxu0 0.0
      %472 = vmatprep.subr.mxu0 0.0
      %473 = vmatpush1.msra.mxu0 0.0
      %474 = vmatprep.subr.mxu0 0.0
      %475 = vmatpush1.msra.mxu0 0.0
      %476 = vmatprep.subr.mxu0 0.0
      %477 = vmatpush1.msra.mxu0 0.0
      %478 = vmatprep.subr.mxu0 0.0
      %479 = vmatpush1.msra.mxu0 0.0
      %480 = vmatprep.mubr.f32.mxu0 0.0
      %481 = vmatmul.mubr.f32.gmra.mrb[0].mxu0 %v414
      %v482 = vpop.f32.mrb[0].mxu0
      %v483 = vadd.f32 0.0, %v482
      %v484 = vpop.f32.mrb[0].mxu0
      %v485 = vadd.f32 0.0, %v484
      %486 = vdwg.mxu0
      %v489 = vcombine.low %v483, %v485
      %v491 = vadd.f32 %v274, %v489
      %493 = vset.pattern.permute.xlu0 0
      %494 = vperm.xlu0 %493, %v273
      %v495 = vpop.permute.xlu0 %494
      %v497 = vunpack.c.l.s4 839922192
      %v498 = vunpack.c.0.s8 %v497
      %v499 = vlaneseq
      %v500 = vshrl.u32 %v499, 7
      %v501 = vsub.s32 %v498, %v500
      %v502 = vrot.slane %v495, %v501
      %v504 = vadd.f32 %v491, %v502
      %505 = vst [vmem:[%s262] sm:$0xff] %v504
      %s506 = smul.u32 2, %s21
      %p507 = scmp.lt.s32.totalorder %s20, 1
      %s508 = scalar_select %p507, %s20, 1
      %p509 = scmp.lt.s32.totalorder %s506, 1
      %s510 = scalar_select %p509, %s506, 1
      %s511 = smul.addr %s508, 2
      %s512 = sadd.s32 %s510, %s511
      %s513 = smul.addr %s512, 4
      %s514 = scalar_lea.vmem %s5, %s513
      // Predicated region
      $region41: #{residual_block_forward.1} parent=39 // pred_check
        %p515 = pneg %p160
      $region42: #{residual_block_forward.1} parent=39 // pred_check_branch
        %517 = sbr.rel (%p515) target = $region44
      $region43: #{residual_block_forward.1} parent=39 // pred_region
        %s518 = smul.u32 2, %s21
      $region44: #{residual_block_forward.1} parent=39 // pred_fallthru
        _
    $region40: #{residual_block_forward.1} parent=5 // pred_fallthru
      _
    %p519 = scmp.le.s32.totalorder 2, %s11
    // Predicated region
    $region45: #{residual_block_forward.1} parent=5 // pred_check
      %p520 = pneg %p519
    $region46: #{residual_block_forward.1} parent=5 // pred_check_branch
      %522 = sbr.rel (%p520) target = $region48
    $region47: #{residual_block_forward.1} parent=5 // pred_region
      %s523 = ssub.s32 %s11, 2
      // Predicated region
      $region49: #{residual_block_forward.1} parent=47 // pred_check
        %p524 = pneg %p166
      $region50: #{residual_block_forward.1} parent=47 // pred_check_branch
        %526 = sbr.rel (%p524) target = $region52
      $region51: #{residual_block_forward.1} parent=47 // pred_region
        %s527 = smul.u32 2, %s23
        %p528 = scmp.lt.s32.totalorder %s22, 1
        %s529 = scalar_select %p528, %s22, 1
        %p530 = scmp.lt.s32.totalorder %s527, 1
        %s531 = scalar_select %p530, %s527, 1
        %s532 = smul.addr %s529, 2
        %s533 = sadd.s32 %s531, %s532
        %s534 = smul.addr %s533, 4
        %s535 = scalar_lea.vmem %s5, %s534
      $region52: #{residual_block_forward.1} parent=47 // pred_fallthru
        _
    $region48: #{residual_block_forward.1} parent=5 // pred_fallthru
      _
  $region6: #{residual_block_forward.1} parent=0 // loop_footer
    %s15 = sadd.s32 1, %s11
  $region7: #{residual_block_forward.1} parent=0 // loop_footer_branch
    %10 = sbr.rel target = $region3
  $region8: #{residual_block_forward.1} parent=0 // loop_exit
    _

</llo_original>
